<compile_context>
chip_gen: v7x
topology: tpu7x:2x2x1
jax: 0.10.0
libtpu: 0.0.40
codegen_flags: <defaults>
</compile_context>

<pallas_src>
import numpy as np
import jax
import jax.numpy as jnp
from jax.experimental import pallas as pl
from jax.experimental.pallas import tpu as pltpu


def _roi_pool_kernel(batch_idx_ref, bounds_ref, x_ref, out_ref):
    # batch_idx_ref: (K,)   int32 SMEM (consumed by the index_map only)
    # bounds_ref:    (4, K) int32 SMEM rows = [start_w, start_h, end_w, end_h]
    # x_ref:   (H, W, CT)   channels-last feature-map tile of this ROI's batch
    # out_ref: (PH, PW, CT) pooled output tile for this ROI / channel tile
    del batch_idx_ref
    r = pl.program_id(1)  # ROI index; grid = (num_c_tiles, K)

    H, W, _ = x_ref.shape
    PH, PW, _ = out_ref.shape

    roi_start_w = bounds_ref[0, r]
    roi_start_h = bounds_ref[1, r]
    roi_end_w = bounds_ref[2, r]
    roi_end_h = bounds_ref[3, r]

    roi_w = jnp.maximum(roi_end_w - roi_start_w + 1, 1)
    roi_h = jnp.maximum(roi_end_h - roi_start_h + 1, 1)
    bin_h = roi_h.astype(jnp.float32) / jnp.float32(PH)
    bin_w = roi_w.astype(jnp.float32) / jnp.float32(PW)

    # Compute in f32 regardless of storage dtype (safe on v5e, no-op for f32).
    xf = x_ref[...].astype(jnp.float32)  # (H, W, CT), C on lanes
    neg_inf = jnp.float32(-jnp.inf)

    h_iota = jax.lax.broadcasted_iota(jnp.int32, (H, 1), 0)  # (H, 1)
    w_iota = jax.lax.broadcasted_iota(jnp.int32, (W, 1), 0)  # (W, 1)

    # --- Precompute all bin boundaries (scalars) and masks once. ---
    h_starts, h_ends, h_masks = [], [], []
    for ph in range(PH):
        hs = jnp.clip(
            jnp.floor(jnp.float32(ph) * bin_h).astype(jnp.int32) + roi_start_h, 0, H)
        he = jnp.clip(
            jnp.ceil(jnp.float32(ph + 1) * bin_h).astype(jnp.int32) + roi_start_h, 0, H)
        h_starts.append(hs)
        h_ends.append(he)
        h_masks.append((h_iota >= hs) & (h_iota < he))            # (H, 1)

    w_starts, w_ends, w_masks = [], [], []
    for pw in range(PW):
        ws = jnp.clip(
            jnp.floor(jnp.float32(pw) * bin_w).astype(jnp.int32) + roi_start_w, 0, W)
        we = jnp.clip(
            jnp.ceil(jnp.float32(pw + 1) * bin_w).astype(jnp.int32) + roi_start_w, 0, W)
        w_starts.append(ws)
        w_ends.append(we)
        w_masks.append((w_iota >= ws) & (w_iota < we))             # (W, 1)

    # --- Stage 1: reduce H -> PH with row masks (VPU max over leading axis). ---
    stage1 = []
    for ph in range(PH):
        masked = jnp.where(h_masks[ph][:, :, None], xf, neg_inf)   # (H, W, CT)
        stage1.append(jnp.max(masked, axis=0))                     # (W, CT)

    # --- Stage 2: reduce W -> PW on the small (W, CT) intermediates. ---
    rows = []
    for ph in range(PH):
        s1 = stage1[ph]                                            # (W, CT)
        cols = []
        for pw in range(PW):
            masked = jnp.where(w_masks[pw], s1, neg_inf)           # (W, CT)
            maxv = jnp.max(masked, axis=0)                         # (CT,)
            is_empty = (h_ends[ph] <= h_starts[ph]) | (w_ends[pw] <= w_starts[pw])
            maxv = jnp.where(is_empty, jnp.zeros_like(maxv), maxv)
            cols.append(maxv)
        rows.append(jnp.stack(cols, axis=0))                       # (PW, CT)
    out_ref[...] = jnp.stack(rows, axis=0).astype(out_ref.dtype)   # (PH, PW, CT)


class ROIPool:
    """JAX/Pallas equivalent of the PyTorch ROIPool module (forward only)."""

    def __init__(self, output_size, spatial_scale):
        if isinstance(output_size, int):
            output_size = (output_size, output_size)
        self.output_size = tuple(output_size)
        self.spatial_scale = float(spatial_scale)

    def __call__(self, x, rois):
        return roi_pool(x, rois, self.output_size, self.spatial_scale)


def roi_pool(x, rois, output_size, spatial_scale):
    # x:    (N, C, H, W) float
    # rois: (K, 5) float  [batch_idx, x1, y1, x2, y2] in input-image coordinates
    N, C, H, W = x.shape
    K = rois.shape[0]
    PH, PW = output_size

    # Channels-last so C lands on the 128-lane axis inside the kernel.
    x_nhwc = jnp.transpose(x, (0, 2, 3, 1))  # (N, H, W, C)

    batch_idx = jnp.clip(rois[:, 0].astype(jnp.int32), 0, N - 1)   # (K,)
    # C++ kernel uses round(): round-half-away-from-zero (handles negative coords).
    scaled = rois[:, 1:5] * spatial_scale
    bounds = (jnp.sign(scaled) * jnp.floor(jnp.abs(scaled) + 0.5)).astype(jnp.int32)

    # Sort ROIs by batch index so consecutive grid steps reuse the same
    # feature-map block (Pallas skips the re-DMA when the block index repeats).
    order = jnp.argsort(batch_idx)
    inv_order = jnp.argsort(order)
    batch_idx_s = batch_idx[order]                 # (K,)
    bounds_s = bounds[order].T                     # (4, K): sw, sh, ew, eh  (K last -> tiny SMEM pad)

    # Channel tiling: keep the (double-buffered) input block comfortably inside
    # VMEM (mandatory on v7x's 64 MiB). Tiling requires CT % 128 == 0.
    itemsize = jnp.dtype(x.dtype).itemsize
    CT = C
    if C % 128 == 0:
        budget = 12 << 20  # bytes per single input buffer
        while CT > 128 and CT % 256 == 0 and H * W * CT * itemsize > budget:
            CT //= 2
    n_ct = C // CT

    in_block_bytes = H * W * CT * itemsize
    out_block_bytes = PH * PW * CT * itemsize
    vmem_limit = int(min(max(2 * in_block_bytes + 2 * out_block_bytes + (8 << 20),
                             16 << 20), 64 << 20))

    grid_spec = pltpu.PrefetchScalarGridSpec(
        num_scalar_prefetch=2,
        grid=(n_ct, K),
        in_specs=[
            pl.BlockSpec((None, H, W, CT),
                         lambda c, r, bidx, bnd: (bidx[r], 0, 0, c)),
        ],
        out_specs=pl.BlockSpec((None, PH, PW, CT),
                               lambda c, r, bidx, bnd: (r, 0, 0, c)),
    )

    # TODO(synk): for very large K with tiny ROIs, batching several ROIs per grid
    # step (inner fori_loop over per-batch ROI ranges) would further amortize the
    # ~0.35us/step pipeline overhead.
    out_nhwc = pl.pallas_call(
        _roi_pool_kernel,
        out_shape=jax.ShapeDtypeStruct((K, PH, PW, C), x.dtype),
        grid_spec=grid_spec,
        compiler_params=pltpu.CompilerParams(
            dimension_semantics=("parallel", "parallel"),
            vmem_limit_bytes=vmem_limit),
    )(batch_idx_s, bounds_s, x_nhwc)

    out_nhwc = out_nhwc[inv_order]                   # undo ROI sort
    return jnp.transpose(out_nhwc, (0, 3, 1, 2))     # (K, C, PH, PW)


def _roi_pool_ref(x, rois, output_size, spatial_scale):
    """Pure numpy reference matching the legacy CUDA roi_pool_forward."""
    x = np.asarray(x)
    rois = np.asarray(rois)
    N, C, H, W = x.shape
    K = rois.shape[0]
    PH, PW = output_size

    def rnd(v):  # round half away from zero, like C++ round()
        return int(np.sign(v) * np.floor(np.abs(v) + 0.5))

    out = np.zeros((K, C, PH, PW), dtype=np.float32)
    for n in range(K):
        b = int(rois[n, 0])
        rsw = rnd(rois[n, 1] * spatial_scale)
        rsh = rnd(rois[n, 2] * spatial_scale)
        rew = rnd(rois[n, 3] * spatial_scale)
        reh = rnd(rois[n, 4] * spatial_scale)
        roi_w = max(rew - rsw + 1, 1)
        roi_h = max(reh - rsh + 1, 1)
        bin_h = roi_h / PH
        bin_w = roi_w / PW
        for ph in range(PH):
            for pw in range(PW):
                hs = min(max(int(np.floor(ph * bin_h)) + rsh, 0), H)
                he = min(max(int(np.ceil((ph + 1) * bin_h)) + rsh, 0), H)
                ws = min(max(int(np.floor(pw * bin_w)) + rsw, 0), W)
                we = min(max(int(np.ceil((pw + 1) * bin_w)) + rsw, 0), W)
                if he <= hs or we <= ws:
                    out[n, :, ph, pw] = 0.0
                else:
                    out[n, :, ph, pw] = x[b, :, hs:he, ws:we].max(axis=(1, 2))
    return out


if __name__ == "__main__":
    key = jax.random.PRNGKey(0)
    N, C, H, W = 2, 4, 16, 16
    output_size = (2, 2)
    spatial_scale = 0.5  # input image is 32x32, feature map is 16x16

    x = jax.random.normal(key, (N, C, H, W), dtype=jnp.float32)
    # [batch_idx, x1, y1, x2, y2] in input-image coordinates.
    rois = jnp.array(
        [
            [0.0, 0.0, 0.0, 15.0, 15.0],
            [1.0, 4.0, 4.0, 28.0, 24.0],
            [0.0, 8.0, 2.0, 30.0, 30.0],
        ],
        dtype=jnp.float32,
    )

    module = ROIPool(output_size, spatial_scale)
    out = module(x, rois)
    out = jax.block_until_ready(out)

    ref = _roi_pool_ref(x, rois, output_size, spatial_scale)
    np.testing.assert_allclose(np.asarray(out), ref, rtol=1e-6, atol=1e-6)

    print("KERNEL_OK")
</pallas_src>

<mosaic_0001>
module attributes {stable_mosaic.version = 11 : i64} {
  func.func @_roi_pool_kernel(%arg0: i32, %arg1: i32, %arg2: memref<3xi32, #tpu.memory_space<smem>>, %arg3: memref<4x3xi32, #tpu.memory_space<smem>>, %arg4: memref<1x16x16x4xf32, #tpu.memory_space<vmem>>, %arg5: memref<1x2x2x4xf32, #tpu.memory_space<vmem>>) attributes {dimension_semantics = [#tpu.dimension_semantics<parallel>, #tpu.dimension_semantics<parallel>], iteration_bounds = array<i64: 1, 3>, scalar_prefetch = 2 : i64, scratch_operands = 0 : i64, tpu.core_type = #tpu.core_type<tc>, window_params = [{transform_indices = @transform_0, window_bounds = array<i64: 1, 16, 16, 4>}, {transform_indices = @transform_1, window_bounds = array<i64: 1, 2, 2, 4>}]} {
    %c0 = arith.constant 0 : index
    %0 = arith.index_cast %arg1 : i32 to index
    %1 = memref.load %arg3[%c0, %0] : memref<4x3xi32, #tpu.memory_space<smem>>
    %c1 = arith.constant 1 : index
    %2 = arith.index_cast %arg1 : i32 to index
    %3 = memref.load %arg3[%c1, %2] : memref<4x3xi32, #tpu.memory_space<smem>>
    %c2 = arith.constant 2 : index
    %4 = arith.index_cast %arg1 : i32 to index
    %5 = memref.load %arg3[%c2, %4] : memref<4x3xi32, #tpu.memory_space<smem>>
    %c3 = arith.constant 3 : index
    %6 = arith.index_cast %arg1 : i32 to index
    %7 = memref.load %arg3[%c3, %6] : memref<4x3xi32, #tpu.memory_space<smem>>
    %8 = arith.subi %5, %1 : i32
    %c1_i32 = arith.constant 1 : i32
    %9 = arith.addi %8, %c1_i32 : i32
    %c1_i32_0 = arith.constant 1 : i32
    %10 = arith.maxsi %9, %c1_i32_0 : i32
    %11 = arith.subi %7, %3 : i32
    %c1_i32_1 = arith.constant 1 : i32
    %12 = arith.addi %11, %c1_i32_1 : i32
    %c1_i32_2 = arith.constant 1 : i32
    %13 = arith.maxsi %12, %c1_i32_2 : i32
    %14 = arith.sitofp %13 : i32 to f32
    %cst = arith.constant 2.000000e+00 : f32
    %15 = arith.divf %14, %cst : f32
    %16 = arith.sitofp %10 : i32 to f32
    %cst_3 = arith.constant 2.000000e+00 : f32
    %17 = arith.divf %16, %cst_3 : f32
    %c0_4 = arith.constant 0 : index
    %c0_5 = arith.constant 0 : index
    %c0_6 = arith.constant 0 : index
    %c0_7 = arith.constant 0 : index
    %18 = vector.load %arg4[%c0_4, %c0_5, %c0_6, %c0_7] : memref<1x16x16x4xf32, #tpu.memory_space<vmem>>, vector<1x16x16x4xf32>
    %19 = vector.shape_cast %18 : vector<1x16x16x4xf32> to vector<16x16x4xf32>
    %20 = tpu.iota {dimensions = array<i32: 0>} : vector<16x1xi32>
    %21 = tpu.iota {dimensions = array<i32: 0>} : vector<16x1xi32>
    %cst_8 = arith.constant 0.000000e+00 : f32
    %22 = arith.mulf %cst_8, %15 : f32
    %23 = math.floor %22 : f32
    %24 = arith.fptosi %23 : f32 to i32
    %25 = arith.addi %24, %3 : i32
    %c0_i32 = arith.constant 0 : i32
    %c16_i32 = arith.constant 16 : i32
    %26 = arith.maxsi %c0_i32, %25 : i32
    %27 = arith.minsi %c16_i32, %26 : i32
    %cst_9 = arith.constant 1.000000e+00 : f32
    %28 = arith.mulf %cst_9, %15 : f32
    %29 = math.ceil %28 : f32
    %30 = arith.fptosi %29 : f32 to i32
    %31 = arith.addi %30, %3 : i32
    %c0_i32_10 = arith.constant 0 : i32
    %c16_i32_11 = arith.constant 16 : i32
    %32 = arith.maxsi %c0_i32_10, %31 : i32
    %33 = arith.minsi %c16_i32_11, %32 : i32
    %34 = vector.broadcast %27 : i32 to vector<16x1xi32>
    %35 = arith.cmpi sge, %20, %34 : vector<16x1xi32>
    %36 = vector.broadcast %33 : i32 to vector<16x1xi32>
    %37 = arith.cmpi slt, %20, %36 : vector<16x1xi32>
    %38 = arith.andi %35, %37 : vector<16x1xi1>
    %cst_12 = arith.constant 1.000000e+00 : f32
    %39 = arith.mulf %cst_12, %15 : f32
    %40 = math.floor %39 : f32
    %41 = arith.fptosi %40 : f32 to i32
    %42 = arith.addi %41, %3 : i32
    %c0_i32_13 = arith.constant 0 : i32
    %c16_i32_14 = arith.constant 16 : i32
    %43 = arith.maxsi %c0_i32_13, %42 : i32
    %44 = arith.minsi %c16_i32_14, %43 : i32
    %cst_15 = arith.constant 2.000000e+00 : f32
    %45 = arith.mulf %cst_15, %15 : f32
    %46 = math.ceil %45 : f32
    %47 = arith.fptosi %46 : f32 to i32
    %48 = arith.addi %47, %3 : i32
    %c0_i32_16 = arith.constant 0 : i32
    %c16_i32_17 = arith.constant 16 : i32
    %49 = arith.maxsi %c0_i32_16, %48 : i32
    %50 = arith.minsi %c16_i32_17, %49 : i32
    %51 = vector.broadcast %44 : i32 to vector<16x1xi32>
    %52 = arith.cmpi sge, %20, %51 : vector<16x1xi32>
    %53 = vector.broadcast %50 : i32 to vector<16x1xi32>
    %54 = arith.cmpi slt, %20, %53 : vector<16x1xi32>
    %55 = arith.andi %52, %54 : vector<16x1xi1>
    %cst_18 = arith.constant 0.000000e+00 : f32
    %56 = arith.mulf %cst_18, %17 : f32
    %57 = math.floor %56 : f32
    %58 = arith.fptosi %57 : f32 to i32
    %59 = arith.addi %58, %1 : i32
    %c0_i32_19 = arith.constant 0 : i32
    %c16_i32_20 = arith.constant 16 : i32
    %60 = arith.maxsi %c0_i32_19, %59 : i32
    %61 = arith.minsi %c16_i32_20, %60 : i32
    %cst_21 = arith.constant 1.000000e+00 : f32
    %62 = arith.mulf %cst_21, %17 : f32
    %63 = math.ceil %62 : f32
    %64 = arith.fptosi %63 : f32 to i32
    %65 = arith.addi %64, %1 : i32
    %c0_i32_22 = arith.constant 0 : i32
    %c16_i32_23 = arith.constant 16 : i32
    %66 = arith.maxsi %c0_i32_22, %65 : i32
    %67 = arith.minsi %c16_i32_23, %66 : i32
    %68 = vector.broadcast %61 : i32 to vector<16x1xi32>
    %69 = arith.cmpi sge, %21, %68 : vector<16x1xi32>
    %70 = vector.broadcast %67 : i32 to vector<16x1xi32>
    %71 = arith.cmpi slt, %21, %70 : vector<16x1xi32>
    %72 = arith.andi %69, %71 : vector<16x1xi1>
    %cst_24 = arith.constant 1.000000e+00 : f32
    %73 = arith.mulf %cst_24, %17 : f32
    %74 = math.floor %73 : f32
    %75 = arith.fptosi %74 : f32 to i32
    %76 = arith.addi %75, %1 : i32
    %c0_i32_25 = arith.constant 0 : i32
    %c16_i32_26 = arith.constant 16 : i32
    %77 = arith.maxsi %c0_i32_25, %76 : i32
    %78 = arith.minsi %c16_i32_26, %77 : i32
    %cst_27 = arith.constant 2.000000e+00 : f32
    %79 = arith.mulf %cst_27, %17 : f32
    %80 = math.ceil %79 : f32
    %81 = arith.fptosi %80 : f32 to i32
    %82 = arith.addi %81, %1 : i32
    %c0_i32_28 = arith.constant 0 : i32
    %c16_i32_29 = arith.constant 16 : i32
    %83 = arith.maxsi %c0_i32_28, %82 : i32
    %84 = arith.minsi %c16_i32_29, %83 : i32
    %85 = vector.broadcast %78 : i32 to vector<16x1xi32>
    %86 = arith.cmpi sge, %21, %85 : vector<16x1xi32>
    %87 = vector.broadcast %84 : i32 to vector<16x1xi32>
    %88 = arith.cmpi slt, %21, %87 : vector<16x1xi32>
    %89 = arith.andi %86, %88 : vector<16x1xi1>
    %90 = vector.shape_cast %38 : vector<16x1xi1> to vector<16x1x1xi1>
    %cst_30 = arith.constant 0xFF800000 : f32
    %91 = vector.shape_cast %90 : vector<16x1x1xi1> to vector<16x1x1xi1>
    %92 = vector.broadcast %91 : vector<16x1x1xi1> to vector<16x16x4xi1>
    %93 = vector.broadcast %cst_30 : f32 to vector<16x16x4xf32>
    %94 = arith.select %92, %19, %93 : vector<16x16x4xi1>, vector<16x16x4xf32>
    %cst_31 = arith.constant dense<0xFF800000> : vector<16x4xf32>
    %95 = vector.multi_reduction <maximumf>, %94, %cst_31 [0] : vector<16x16x4xf32> to vector<16x4xf32>
    %96 = vector.shape_cast %55 : vector<16x1xi1> to vector<16x1x1xi1>
    %cst_32 = arith.constant 0xFF800000 : f32
    %97 = vector.shape_cast %96 : vector<16x1x1xi1> to vector<16x1x1xi1>
    %98 = vector.broadcast %97 : vector<16x1x1xi1> to vector<16x16x4xi1>
    %99 = vector.broadcast %cst_32 : f32 to vector<16x16x4xf32>
    %100 = arith.select %98, %19, %99 : vector<16x16x4xi1>, vector<16x16x4xf32>
    %cst_33 = arith.constant dense<0xFF800000> : vector<16x4xf32>
    %101 = vector.multi_reduction <maximumf>, %100, %cst_33 [0] : vector<16x16x4xf32> to vector<16x4xf32>
    %cst_34 = arith.constant 0xFF800000 : f32
    %102 = vector.shape_cast %72 : vector<16x1xi1> to vector<16x1xi1>
    %103 = vector.broadcast %102 : vector<16x1xi1> to vector<16x4xi1>
    %104 = vector.broadcast %cst_34 : f32 to vector<16x4xf32>
    %105 = arith.select %103, %95, %104 : vector<16x4xi1>, vector<16x4xf32>
    %cst_35 = arith.constant dense<0xFF800000> : vector<4xf32>
    %106 = vector.multi_reduction <maximumf>, %105, %cst_35 [0] : vector<16x4xf32> to vector<4xf32>
    %107 = arith.cmpi sle, %33, %27 : i32
    %108 = arith.cmpi sle, %67, %61 : i32
    %109 = arith.ori %107, %108 : i1
    %cst_36 = arith.constant 0.000000e+00 : f32
    %110 = vector.broadcast %cst_36 : f32 to vector<4xf32>
    %111 = arith.select %109, %110, %106 : vector<4xf32>
    %cst_37 = arith.constant 0xFF800000 : f32
    %112 = vector.shape_cast %89 : vector<16x1xi1> to vector<16x1xi1>
    %113 = vector.broadcast %112 : vector<16x1xi1> to vector<16x4xi1>
    %114 = vector.broadcast %cst_37 : f32 to vector<16x4xf32>
    %115 = arith.select %113, %95, %114 : vector<16x4xi1>, vector<16x4xf32>
    %cst_38 = arith.constant dense<0xFF800000> : vector<4xf32>
    %116 = vector.multi_reduction <maximumf>, %115, %cst_38 [0] : vector<16x4xf32> to vector<4xf32>
    %117 = arith.cmpi sle, %33, %27 : i32
    %118 = arith.cmpi sle, %84, %78 : i32
    %119 = arith.ori %117, %118 : i1
    %cst_39 = arith.constant 0.000000e+00 : f32
    %120 = vector.broadcast %cst_39 : f32 to vector<4xf32>
    %121 = arith.select %119, %120, %116 : vector<4xf32>
    %122 = vector.shape_cast %111 : vector<4xf32> to vector<1x4xf32>
    %123 = vector.shape_cast %121 : vector<4xf32> to vector<1x4xf32>
    %124 = tpu.concatenate %122, %123 in 0 : vector<1x4xf32>, vector<1x4xf32> -> vector<2x4xf32>
    %cst_40 = arith.constant 0xFF800000 : f32
    %125 = vector.shape_cast %72 : vector<16x1xi1> to vector<16x1xi1>
    %126 = vector.broadcast %125 : vector<16x1xi1> to vector<16x4xi1>
    %127 = vector.broadcast %cst_40 : f32 to vector<16x4xf32>
    %128 = arith.select %126, %101, %127 : vector<16x4xi1>, vector<16x4xf32>
    %cst_41 = arith.constant dense<0xFF800000> : vector<4xf32>
    %129 = vector.multi_reduction <maximumf>, %128, %cst_41 [0] : vector<16x4xf32> to vector<4xf32>
    %130 = arith.cmpi sle, %50, %44 : i32
    %131 = arith.cmpi sle, %67, %61 : i32
    %132 = arith.ori %130, %131 : i1
    %cst_42 = arith.constant 0.000000e+00 : f32
    %133 = vector.broadcast %cst_42 : f32 to vector<4xf32>
    %134 = arith.select %132, %133, %129 : vector<4xf32>
    %cst_43 = arith.constant 0xFF800000 : f32
    %135 = vector.shape_cast %89 : vector<16x1xi1> to vector<16x1xi1>
    %136 = vector.broadcast %135 : vector<16x1xi1> to vector<16x4xi1>
    %137 = vector.broadcast %cst_43 : f32 to vector<16x4xf32>
    %138 = arith.select %136, %101, %137 : vector<16x4xi1>, vector<16x4xf32>
    %cst_44 = arith.constant dense<0xFF800000> : vector<4xf32>
    %139 = vector.multi_reduction <maximumf>, %138, %cst_44 [0] : vector<16x4xf32> to vector<4xf32>
    %140 = arith.cmpi sle, %50, %44 : i32
    %141 = arith.cmpi sle, %84, %78 : i32
    %142 = arith.ori %140, %141 : i1
    %cst_45 = arith.constant 0.000000e+00 : f32
    %143 = vector.broadcast %cst_45 : f32 to vector<4xf32>
    %144 = arith.select %142, %143, %139 : vector<4xf32>
    %145 = vector.shape_cast %134 : vector<4xf32> to vector<1x4xf32>
    %146 = vector.shape_cast %144 : vector<4xf32> to vector<1x4xf32>
    %147 = tpu.concatenate %145, %146 in 0 : vector<1x4xf32>, vector<1x4xf32> -> vector<2x4xf32>
    %148 = vector.shape_cast %124 : vector<2x4xf32> to vector<1x2x4xf32>
    %149 = vector.shape_cast %147 : vector<2x4xf32> to vector<1x2x4xf32>
    %150 = tpu.concatenate %148, %149 in 0 : vector<1x2x4xf32>, vector<1x2x4xf32> -> vector<2x2x4xf32>
    %c0_46 = arith.constant 0 : index
    %c0_47 = arith.constant 0 : index
    %c0_48 = arith.constant 0 : index
    %c0_49 = arith.constant 0 : index
    %151 = vector.load %arg5[%c0_46, %c0_47, %c0_48, %c0_49] : memref<1x2x2x4xf32, #tpu.memory_space<vmem>>, vector<1x2x2x4xf32>
    %152 = vector.shape_cast %151 : vector<1x2x2x4xf32> to vector<2x2x4xf32>
    %153 = vector.shape_cast %150 : vector<2x2x4xf32> to vector<1x2x2x4xf32>
    tpu.vector_store %arg5[%c0_46, %c0_47, %c0_48, %c0_49], %153 {strides = array<i32>} : memref<1x2x2x4xf32, #tpu.memory_space<vmem>>, vector<1x2x2x4xf32>,
    return
  }
  func.func @transform_0(%arg0: i32, %arg1: i32, %arg2: memref<3xi32, #tpu.memory_space<smem>>, %arg3: memref<4x3xi32, #tpu.memory_space<smem>>) -> (i32, i32, i32, i32) {
    %0 = arith.index_cast %arg1 : i32 to index
    %1 = memref.load %arg2[%0] : memref<3xi32, #tpu.memory_space<smem>>
    %c0_i32 = arith.constant 0 : i32
    %c0_i32_0 = arith.constant 0 : i32
    %c0_i32_1 = arith.constant 0 : i32
    return %1, %c0_i32, %c0_i32_0, %arg0 : i32, i32, i32, i32
  }
  func.func @transform_1(%arg0: i32, %arg1: i32, %arg2: memref<3xi32, #tpu.memory_space<smem>>, %arg3: memref<4x3xi32, #tpu.memory_space<smem>>) -> (i32, i32, i32, i32) {
    %c0_i32 = arith.constant 0 : i32
    %c0_i32_0 = arith.constant 0 : i32
    %c0_i32_1 = arith.constant 0 : i32
    return %arg1, %c0_i32, %c0_i32_0, %arg0 : i32, i32, i32, i32
  }
}

</mosaic_0001>

<llo_original>
// kernel: tpu_custom_call.1
$region0: #{tpu_custom_call.1}
  #allocation0 [shape = 'u32[]', space=smem, size = 0x4, offset = 0x4, fixed_abs, tag = 'smem constant byte address 0x4 - core index']
  #allocation1 [shape = 'u32[144,128]{1,0:T(1,128)}', space=vmem, size = 0x12000, scoped, tag = 'internal scratch']
  #allocation2 [shape = 's32[1]{0}', space=sflag, size = 0x4, scoped, tag = 'scoped memory for tpu_custom_call.1']
  #allocation3 [shape = 'u8[512]{0}', space=smem, size = 0x200, scoped, tag = 'prefetched SMEM operand 0']
  #allocation4 [shape = 'u8[2048]{0}', space=smem, size = 0x800, scoped, tag = 'prefetched SMEM operand 1']
  %s0 = inlined_call_operand.vmem [shape: s32[3], index: 0, kind: input, shape index: {}]
  %s1 = inlined_call_operand.vmem [shape: s32[4,3], index: 1, kind: input, shape index: {}]
  %s2 = inlined_call_operand.vmem [shape: f32[2,16,16,4], index: 2, kind: input, shape index: {}]
  %s3 = inlined_call_operand.hbm [shape: f32[3,2,2,4], index: 3, kind: output, shape index: {}]
  %s4 = sld [smem:[#allocation0]]
  $region37: #{tpu_custom_call.1} parent=0
    _
  %s6 = ssub.s32 1, %s4
  %s7 = scalar_select 0, %s6, %s4
  %s8 = sshll.u32 %s0, 4
  %s9 = int_to_ptr.vmem [resolvable:$true] %s8
  %11 = dma.vmem_to_smem %s9, 16, [#allocation3], [#allocation2]
  %s12 = sshll.u32 %s1, 4
  %s13 = int_to_ptr.vmem [resolvable:$true] %s12
  %15 = dma.vmem_to_smem %s13, 64, [#allocation4], [#allocation2]
  %16 = dma.done [#allocation2], 80
  %17 = sfence
  $region1: #{tpu_custom_call.1} parent=0
    #allocation5 [shape = 'u8[4096]{0}', space=vmem, size = 0x1000, scoped, tag = 'output window, operand 0']
    #allocation6 [shape = 's32[2]{0}', space=sflag, size = 0x8, scoped, tag = 'scoped memory for tpu_custom_call.1']
    %18 = vsyncpa [#allocation6], 0
    %s19 = scalar_lea.sflag [#allocation6], 1
    %20 = vsyncpa %s19, 0
    loop: start=0, step=1, limit=5
    $region2: #{tpu_custom_call.1} parent=1 // loop_pre_header
      _
    $region3: #{tpu_custom_call.1} parent=1 // loop_header
      %s22 = sphi 0, %s26
      %p23 = scmp.ge.s32.totalorder %s22, 5
      %s29 = sphi 0, %s41
      %s30 = sphi 0, %s37
      %s31 = sphi 0, %s29
      %s32 = sphi 0, %s30
      %s33 = sphi 0, %s31
      %s34 = sphi 0, %s32
      %s48 = sphi 0, %s50
      %s51 = sphi 0, %s48
      %s52 = sphi 0, %s51
      %s68 = sphi 0, %s52
      %s76 = sphi 0, %s78
      %s79 = sphi 0, %s76
      %s80 = sphi 0, %s79
      %s96 = sphi 0, %s80
    $region4: #{tpu_custom_call.1} parent=1 // loop_header_branch
      %25 = sbr.rel (%p23) target = $region8
    $region5: #{tpu_custom_call.1} parent=1 // loop_body
      %s27 = ssub.s32 %s22, 1
      %s28 = ssub.s32 %s22, 2
      %s35 = sadd.s32 1, %s30
      %p36 = scmp.ge.s32.totalorder %s35, 3
      %s37 = scalar_select %p36, 0, %s35
      %s38 = sadd.s32 1, %s29
      %s39 = scalar_select %p36, %s38, %s29
      %p40 = scmp.ge.s32.totalorder %s39, 1
      %s41 = scalar_select %p40, 0, %s39
      %s42 = sld [smem:[#allocation3 + %s30]]
      %s43 = sld [smem:[#allocation3 + %s37]]
      %s44 = ssub.s32 %s42, %s43
      %s45 = ssub.s32 %s29, %s41
      %s46 = sor.u32 %s44, %s45
      %p47 = scmp.eq.s32.totalorder %s46, 0
      %s49 = sadd.s32 %s48, 1
      %s50 = scalar_select %p47, %s48, %s49
      %p53 = pneg %p47
      %p54 = scmp.eq.s32.totalorder %s22, 2
      %p55 = por %p53, %p54
      %p56 = scmp.ne.s32.totalorder %s48, %s51
      %p57 = scmp.eq.s32.totalorder %s22, 0
      %p58 = por %p56, %p57
      %p59 = scmp.ne.s32.totalorder %s48, %s51
      %p60 = scmp.eq.s32.totalorder %s27, 2
      %p61 = por %p59, %p60
      %p62 = scmp.ne.s32.totalorder %s51, %s52
      %p63 = scmp.eq.s32.totalorder %s27, 0
      %p64 = por %p62, %p63
      %p65 = scmp.ne.s32.totalorder %s51, %s52
      %p66 = scmp.eq.s32.totalorder %s28, 2
      %p67 = por %p65, %p66
      %p69 = scmp.ne.s32.totalorder %s52, %s68
      %p70 = scmp.eq.s32.totalorder %s28, 0
      %p71 = por %p69, %p70
      %s72 = ssub.s32 %s30, %s37
      %s73 = ssub.s32 %s29, %s41
      %s74 = sor.u32 %s72, %s73
      %p75 = scmp.eq.s32.totalorder %s74, 0
      %s77 = sadd.s32 %s76, 1
      %s78 = scalar_select %p75, %s76, %s77
      %p81 = pneg %p75
      %p82 = scmp.eq.s32.totalorder %s22, 2
      %p83 = por %p81, %p82
      %p84 = scmp.ne.s32.totalorder %s76, %s79
      %p85 = scmp.eq.s32.totalorder %s22, 0
      %p86 = por %p84, %p85
      %p87 = scmp.ne.s32.totalorder %s76, %s79
      %p88 = scmp.eq.s32.totalorder %s27, 2
      %p89 = por %p87, %p88
      %p90 = scmp.ne.s32.totalorder %s79, %s80
      %p91 = scmp.eq.s32.totalorder %s27, 0
      %p92 = por %p90, %p91
      %p93 = scmp.ne.s32.totalorder %s79, %s80
      %p94 = scmp.eq.s32.totalorder %s28, 2
      %p95 = por %p93, %p94
      %p97 = scmp.ne.s32.totalorder %s80, %s96
      %p98 = scmp.eq.s32.totalorder %s28, 0
      %p99 = por %p97, %p98
      %p100 = scmp.le.s32.totalorder 1, %s22
      %p101 = scmp.lt.s32.totalorder %s22, 4
      %p102 = pnand %p100, %p101
      %p103 = pneg %p102
      // Predicated region
      $region9: #{tpu_custom_call.1} parent=5 // pred_check
        _
      $region10: #{tpu_custom_call.1} parent=5 // pred_check_branch
        %105 = sbr.rel (%p102) target = $region12
      $region11: #{tpu_custom_call.1} parent=5 // pred_region
        %s106 = ssub.s32 %s22, 1
      $region12: #{tpu_custom_call.1} parent=5 // pred_fallthru
        _
      %p107 = scmp.lt.s32.totalorder %s22, 3
      // Predicated region
      $region13: #{tpu_custom_call.1} parent=5 // pred_check
        %p108 = pneg %p107
      $region14: #{tpu_custom_call.1} parent=5 // pred_check_branch
        %110 = sbr.rel (%p108) target = $region16
      $region15: #{tpu_custom_call.1} parent=5 // pred_region
        // Predicated region
        $region17: #{tpu_custom_call.1} parent=15 // pred_check
          %p111 = pneg %p58
        $region18: #{tpu_custom_call.1} parent=15 // pred_check_branch
          %113 = sbr.rel (%p111) target = $region20
        $region19: #{tpu_custom_call.1} parent=15 // pred_region
          %s114 = sld [smem:[#allocation3 + %s30]]
          %p115 = scmp.lt.s32.totalorder %s114, 1
          %s116 = scalar_select %p115, %s114, 1
          %p117 = scmp.lt.s32.totalorder %s29, 0
          %s118 = scalar_select %p117, %s29, 0
          %s119 = smul.addr %s116, 32
          %s120 = sadd.s32 %s118, %s119
          %s121 = smul.addr %s120, 8
          %s122 = scalar_lea.vmem %s2, %s121
          %s123 = sld [smem:[#allocation3 + %s30]]
        $region20: #{tpu_custom_call.1} parent=15 // pred_fallthru
          _
      $region16: #{tpu_custom_call.1} parent=5 // pred_fallthru
        _
      %p124 = scmp.le.s32.totalorder 1, %s22
      %p125 = scmp.lt.s32.totalorder %s22, 4
      %p126 = pnand %p124, %p125
      %p127 = pneg %p126
      // Predicated region
      $region21: #{tpu_custom_call.1} parent=5 // pred_check
        _
      $region22: #{tpu_custom_call.1} parent=5 // pred_check_branch
        %129 = sbr.rel (%p126) target = $region24
      $region23: #{tpu_custom_call.1} parent=5 // pred_region
        %s130 = ssub.s32 %s22, 1
        %s131 = sld [smem:[#allocation3 + %s32]]
        %p132 = scmp.lt.s32.totalorder %s131, 1
        %s133 = scalar_select %p132, %s131, 1
        %p134 = scmp.lt.s32.totalorder %s31, 0
        %s135 = scalar_select %p134, %s31, 0
        %s136 = smul.addr %s133, 32
        %s137 = sadd.s32 %s135, %s136
        %s138 = smul.addr %s137, 8
        %s139 = scalar_lea.vmem %s2, %s138
        %p140 = pneg %p64
        %p141 = pneg %p61
        %p142 = pneg %p92
        %p143 = pneg %p89
        %s144 = sand.u32 %s79, 1
        %s145 = scalar_lea.sflag [#allocation6], %s144
        %s146 = sand.u32 %s79, 1
        %s147 = smul.addr %s146, 4
        %s148 = scalar_lea.vmem [#allocation5], %s147
        %s149 = sld [smem:[#allocation3 + %s32]]
        %p150 = scmp.lt.s32.totalorder %s149, 1
        %s151 = scalar_select %p150, %s149, 1
        %p152 = scmp.lt.s32.totalorder %s31, 0
        %s153 = scalar_select %p152, %s31, 0
        %s154 = smul.addr %s151, 32
        %s155 = sadd.s32 %s153, %s154
        %s156 = smul.addr %s155, 8
        %s157 = scalar_lea.vmem %s2, %s156
        %s158 = sld [smem:[#allocation3 + %s32]]
        %s159 = sld [smem:[#allocation4 + %s32]]
        %s160 = sshra.s32 %s32, 7
        %s161 = sand.u32 %s32, 127
        %s162 = sadd.s32 %s160, 1
        %s163 = smul.u32 %s162, 128
        %s164 = sshra.s32 %s32, 7
        %s165 = sand.u32 %s32, 127
        %s166 = sadd.s32 %s163, %s165
        %s167 = sld [smem:[#allocation4 + %s166]]
        %s168 = sadd.s32 %s160, 2
        %s169 = smul.u32 %s168, 128
        %s170 = sadd.s32 %s169, %s165
        %s171 = sld [smem:[#allocation4 + %s170]]
        %s172 = sadd.s32 %s160, 3
        %s173 = smul.u32 %s172, 128
        %s174 = sadd.s32 %s173, %s165
        %s175 = sld [smem:[#allocation4 + %s174]]
        %s176 = ssub.s32 %s171, %s159
        %s177 = sadd.s32 %s176, 1
        %p178 = scmp.gt.s32.totalorder %s177, 1
        %s179 = scalar_select %p178, %s177, 1
        %s180 = ssub.s32 %s175, %s167
        %s181 = sadd.s32 %s180, 1
        %p182 = scmp.gt.s32.totalorder %s181, 1
        %s183 = scalar_select %p182, %s181, 1
        %s184 = scvt.s32.f32 %s183
        %v185 = vrcp.pop 2.0
        %s186 = vtos %v185
        %s187 = smul.f32 %s184, %s186
        %s188 = scvt.s32.f32 %s179
        %v189 = vrcp.pop 2.0
        %s190 = vtos %v189
        %s191 = smul.f32 %s188, %s190
        %v192 = vld [vmem:[%s157] sm:$0xff]
        %v193 = vld [vmem:[%s157 + $0x8] sm:$0xff]
        %v194 = vld [vmem:[%s157 + $0x10] sm:$0xff]
        %v195 = vld [vmem:[%s157 + $0x18] sm:$0xff]
        %v196 = vld [vmem:[%s157 + $0x20] sm:$0xff]
        %v197 = vld [vmem:[%s157 + $0x28] sm:$0xff]
        %v198 = vld [vmem:[%s157 + $0x30] sm:$0xff]
        %v199 = vld [vmem:[%s157 + $0x38] sm:$0xff]
        %v200 = vld [vmem:[%s157 + $0x40] sm:$0xff]
        %v201 = vld [vmem:[%s157 + $0x48] sm:$0xff]
        %v202 = vld [vmem:[%s157 + $0x50] sm:$0xff]
        %v203 = vld [vmem:[%s157 + $0x58] sm:$0xff]
        %v204 = vld [vmem:[%s157 + $0x60] sm:$0xff]
        %v205 = vld [vmem:[%s157 + $0x68] sm:$0xff]
        %v206 = vld [vmem:[%s157 + $0x70] sm:$0xff]
        %v207 = vld [vmem:[%s157 + $0x78] sm:$0xff]
        %v208 = vld [vmem:[%s157 + $0x80] sm:$0xff]
        %v209 = vld [vmem:[%s157 + $0x88] sm:$0xff]
        %v210 = vld [vmem:[%s157 + $0x90] sm:$0xff]
        %v211 = vld [vmem:[%s157 + $0x98] sm:$0xff]
        %v212 = vld [vmem:[%s157 + $0xa0] sm:$0xff]
        %v213 = vld [vmem:[%s157 + $0xa8] sm:$0xff]
        %v214 = vld [vmem:[%s157 + $0xb0] sm:$0xff]
        %v215 = vld [vmem:[%s157 + $0xb8] sm:$0xff]
        %v216 = vld [vmem:[%s157 + $0xc0] sm:$0xff]
        %v217 = vld [vmem:[%s157 + $0xc8] sm:$0xff]
        %v218 = vld [vmem:[%s157 + $0xd0] sm:$0xff]
        %v219 = vld [vmem:[%s157 + $0xd8] sm:$0xff]
        %v220 = vld [vmem:[%s157 + $0xe0] sm:$0xff]
        %v221 = vld [vmem:[%s157 + $0xe8] sm:$0xff]
        %v222 = vld [vmem:[%s157 + $0xf0] sm:$0xff]
        %v223 = vld [vmem:[%s157 + $0xf8] sm:$0xff]
        %v224 = vlaneseq
        %v225 = vshrl.u32 %v224, 7
        %v226 = vadd.s32 %v225, 8
        %s227 = smul.f32 %s187, 0.0
        %s228 = sfloor.f32 %s227
        %s229 = scvt.f32.s32.to.zero.pseudo %s228
        %s230 = sadd.s32 %s229, %s167
        %p231 = scmp.gt.s32.totalorder %s230, 0
        %s232 = scalar_select %p231, %s230, 0
        %p233 = scmp.lt.s32.totalorder %s232, 16
        %s234 = scalar_select %p233, %s232, 16
        %s235 = sceil.f32 %s187
        %s236 = scvt.f32.s32.to.zero.pseudo %s235
        %s237 = sadd.s32 %s236, %s167
        %p238 = scmp.gt.s32.totalorder %s237, 0
        %s239 = scalar_select %p238, %s237, 0
        %p240 = scmp.lt.s32.totalorder %s239, 16
        %s241 = scalar_select %p240, %s239, 16
        %v242 = vstv %s234
        %vm243 = vcmp.ge.s32.totalorder %v225, %v242
        %vm244 = vcmp.ge.s32.totalorder %v226, %v242
        %v245 = vstv %s241
        %vm246 = vcmp.lt.s32.totalorder %v225, %v245
        %vm247 = vcmp.lt.s32.totalorder %v226, %v245
        %vm248 = vmand %vm243, %vm246
        %vm249 = vmand %vm244, %vm247
        %s250 = sfloor.f32 %s187
        %s251 = scvt.f32.s32.to.zero.pseudo %s250
        %s252 = sadd.s32 %s251, %s167
        %p253 = scmp.gt.s32.totalorder %s252, 0
        %s254 = scalar_select %p253, %s252, 0
        %p255 = scmp.lt.s32.totalorder %s254, 16
        %s256 = scalar_select %p255, %s254, 16
        %s257 = smul.f32 %s187, 2.0
        %s258 = sceil.f32 %s257
        %s259 = scvt.f32.s32.to.zero.pseudo %s258
        %s260 = sadd.s32 %s259, %s167
        %p261 = scmp.gt.s32.totalorder %s260, 0
        %s262 = scalar_select %p261, %s260, 0
        %p263 = scmp.lt.s32.totalorder %s262, 16
        %s264 = scalar_select %p263, %s262, 16
        %v265 = vstv %s256
        %vm266 = vcmp.ge.s32.totalorder %v225, %v265
        %vm267 = vcmp.ge.s32.totalorder %v226, %v265
        %v268 = vstv %s264
        %vm269 = vcmp.lt.s32.totalorder %v225, %v268
        %vm270 = vcmp.lt.s32.totalorder %v226, %v268
        %vm271 = vmand %vm266, %vm269
        %vm272 = vmand %vm267, %vm270
        %s273 = smul.f32 %s191, 0.0
        %s274 = sfloor.f32 %s273
        %s275 = scvt.f32.s32.to.zero.pseudo %s274
        %s276 = sadd.s32 %s275, %s159
        %p277 = scmp.gt.s32.totalorder %s276, 0
        %s278 = scalar_select %p277, %s276, 0
        %p279 = scmp.lt.s32.totalorder %s278, 16
        %s280 = scalar_select %p279, %s278, 16
        %s281 = sceil.f32 %s191
        %s282 = scvt.f32.s32.to.zero.pseudo %s281
        %s283 = sadd.s32 %s282, %s159
        %p284 = scmp.gt.s32.totalorder %s283, 0
        %s285 = scalar_select %p284, %s283, 0
        %p286 = scmp.lt.s32.totalorder %s285, 16
        %s287 = scalar_select %p286, %s285, 16
        %v288 = vstv %s280
        %vm289 = vcmp.ge.s32.totalorder %v225, %v288
        %vm290 = vcmp.ge.s32.totalorder %v226, %v288
        %v291 = vstv %s287
        %vm292 = vcmp.lt.s32.totalorder %v225, %v291
        %vm293 = vcmp.lt.s32.totalorder %v226, %v291
        %vm294 = vmand %vm289, %vm292
        %vm295 = vmand %vm290, %vm293
        %s296 = sfloor.f32 %s191
        %s297 = scvt.f32.s32.to.zero.pseudo %s296
        %s298 = sadd.s32 %s297, %s159
        %p299 = scmp.gt.s32.totalorder %s298, 0
        %s300 = scalar_select %p299, %s298, 0
        %p301 = scmp.lt.s32.totalorder %s300, 16
        %s302 = scalar_select %p301, %s300, 16
        %s303 = smul.f32 %s191, 2.0
        %s304 = sceil.f32 %s303
        %s305 = scvt.f32.s32.to.zero.pseudo %s304
        %s306 = sadd.s32 %s305, %s159
        %p307 = scmp.gt.s32.totalorder %s306, 0
        %s308 = scalar_select %p307, %s306, 0
        %p309 = scmp.lt.s32.totalorder %s308, 16
        %s310 = scalar_select %p309, %s308, 16
        %v311 = vstv %s302
        %vm312 = vcmp.ge.s32.totalorder %v225, %v311
        %vm313 = vcmp.ge.s32.totalorder %v226, %v311
        %v314 = vstv %s310
        %vm315 = vcmp.lt.s32.totalorder %v225, %v314
        %vm316 = vcmp.lt.s32.totalorder %v226, %v314
        %vm317 = vmand %vm312, %vm315
        %vm318 = vmand %vm313, %vm316
        %v319 = vsel %vm248, 1, 0
        %v320 = vsel %vm249, 1, 0
        %v321 = vlaneseq
        %v322 = vshrl.u32 %v321, 7
        %v323 = vsub.s32 0, %v322
        %v324 = vrot.slane %v319, %v323
        %v325 = vlaneseq
        %v326 = vshrl.u32 %v325, 7
        %v327 = vsub.s32 1, %v326
        %v328 = vrot.slane %v319, %v327
        %v329 = vlaneseq
        %v330 = vshrl.u32 %v329, 7
        %v331 = vsub.s32 2, %v330
        %v332 = vrot.slane %v319, %v331
        %v333 = vlaneseq
        %v334 = vshrl.u32 %v333, 7
        %v335 = vsub.s32 3, %v334
        %v336 = vrot.slane %v319, %v335
        %v337 = vlaneseq
        %v338 = vshrl.u32 %v337, 7
        %v339 = vsub.s32 4, %v338
        %v340 = vrot.slane %v319, %v339
        %v341 = vlaneseq
        %v342 = vshrl.u32 %v341, 7
        %v343 = vsub.s32 5, %v342
        %v344 = vrot.slane %v319, %v343
        %v345 = vlaneseq
        %v346 = vshrl.u32 %v345, 7
        %v347 = vsub.s32 6, %v346
        %v348 = vrot.slane %v319, %v347
        %v349 = vlaneseq
        %v350 = vshrl.u32 %v349, 7
        %v351 = vsub.s32 7, %v350
        %v352 = vrot.slane %v319, %v351
        %v353 = vlaneseq
        %v354 = vshrl.u32 %v353, 7
        %v355 = vsub.s32 0, %v354
        %v356 = vrot.slane %v320, %v355
        %v357 = vlaneseq
        %v358 = vshrl.u32 %v357, 7
        %v359 = vsub.s32 1, %v358
        %v360 = vrot.slane %v320, %v359
        %v361 = vlaneseq
        %v362 = vshrl.u32 %v361, 7
        %v363 = vsub.s32 2, %v362
        %v364 = vrot.slane %v320, %v363
        %v365 = vlaneseq
        %v366 = vshrl.u32 %v365, 7
        %v367 = vsub.s32 3, %v366
        %v368 = vrot.slane %v320, %v367
        %v369 = vlaneseq
        %v370 = vshrl.u32 %v369, 7
        %v371 = vsub.s32 4, %v370
        %v372 = vrot.slane %v320, %v371
        %v373 = vlaneseq
        %v374 = vshrl.u32 %v373, 7
        %v375 = vsub.s32 5, %v374
        %v376 = vrot.slane %v320, %v375
        %v377 = vlaneseq
        %v378 = vshrl.u32 %v377, 7
        %v379 = vsub.s32 6, %v378
        %v380 = vrot.slane %v320, %v379
        %v381 = vlaneseq
        %v382 = vshrl.u32 %v381, 7
        %v383 = vsub.s32 7, %v382
        %v384 = vrot.slane %v320, %v383
        %vm385 = vcmp.ne.s32.totalorder %v324, 0
        %vm386 = vcmp.ne.s32.totalorder %v328, 0
        %vm387 = vcmp.ne.s32.totalorder %v332, 0
        %vm388 = vcmp.ne.s32.totalorder %v336, 0
        %vm389 = vcmp.ne.s32.totalorder %v340, 0
        %vm390 = vcmp.ne.s32.totalorder %v344, 0
        %vm391 = vcmp.ne.s32.totalorder %v348, 0
        %vm392 = vcmp.ne.s32.totalorder %v352, 0
        %vm393 = vcmp.ne.s32.totalorder %v356, 0
        %vm394 = vcmp.ne.s32.totalorder %v360, 0
        %vm395 = vcmp.ne.s32.totalorder %v364, 0
        %vm396 = vcmp.ne.s32.totalorder %v368, 0
        %vm397 = vcmp.ne.s32.totalorder %v372, 0
        %vm398 = vcmp.ne.s32.totalorder %v376, 0
        %vm399 = vcmp.ne.s32.totalorder %v380, 0
        %vm400 = vcmp.ne.s32.totalorder %v384, 0
        %v401 = vsel %vm385, 1, 0
        %v402 = vsel %vm386, 1, 0
        %v403 = vsel %vm387, 1, 0
        %v404 = vsel %vm388, 1, 0
        %v405 = vsel %vm389, 1, 0
        %v406 = vsel %vm390, 1, 0
        %v407 = vsel %vm391, 1, 0
        %v408 = vsel %vm392, 1, 0
        %v409 = vsel %vm393, 1, 0
        %v410 = vsel %vm394, 1, 0
        %v411 = vsel %vm395, 1, 0
        %v412 = vsel %vm396, 1, 0
        %v413 = vsel %vm397, 1, 0
        %v414 = vsel %vm398, 1, 0
        %v415 = vsel %vm399, 1, 0
        %v416 = vsel %vm400, 1, 0
        %vm417 = vcmp.eq.s32.totalorder %v401, 1
        %vm418 = vcmp.eq.s32.totalorder %v402, 1
        %vm419 = vcmp.eq.s32.totalorder %v403, 1
        %vm420 = vcmp.eq.s32.totalorder %v404, 1
        %vm421 = vcmp.eq.s32.totalorder %v405, 1
        %vm422 = vcmp.eq.s32.totalorder %v406, 1
        %vm423 = vcmp.eq.s32.totalorder %v407, 1
        %vm424 = vcmp.eq.s32.totalorder %v408, 1
        %vm425 = vcmp.eq.s32.totalorder %v409, 1
        %vm426 = vcmp.eq.s32.totalorder %v410, 1
        %vm427 = vcmp.eq.s32.totalorder %v411, 1
        %vm428 = vcmp.eq.s32.totalorder %v412, 1
        %vm429 = vcmp.eq.s32.totalorder %v413, 1
        %vm430 = vcmp.eq.s32.totalorder %v414, 1
        %vm431 = vcmp.eq.s32.totalorder %v415, 1
        %vm432 = vcmp.eq.s32.totalorder %v416, 1
        %v433 = vsel %vm417, %v192, -inf
        %v434 = vsel %vm417, %v193, -inf
        %v435 = vsel %vm418, %v194, -inf
        %v436 = vsel %vm418, %v195, -inf
        %v437 = vsel %vm419, %v196, -inf
        %v438 = vsel %vm419, %v197, -inf
        %v439 = vsel %vm420, %v198, -inf
        %v440 = vsel %vm420, %v199, -inf
        %v441 = vsel %vm421, %v200, -inf
        %v442 = vsel %vm421, %v201, -inf
        %v443 = vsel %vm422, %v202, -inf
        %v444 = vsel %vm422, %v203, -inf
        %v445 = vsel %vm423, %v204, -inf
        %v446 = vsel %vm423, %v205, -inf
        %v447 = vsel %vm424, %v206, -inf
        %v448 = vsel %vm424, %v207, -inf
        %v449 = vsel %vm425, %v208, -inf
        %v450 = vsel %vm425, %v209, -inf
        %v451 = vsel %vm426, %v210, -inf
        %v452 = vsel %vm426, %v211, -inf
        %v453 = vsel %vm427, %v212, -inf
        %v454 = vsel %vm427, %v213, -inf
        %v455 = vsel %vm428, %v214, -inf
        %v456 = vsel %vm428, %v215, -inf
        %v457 = vsel %vm429, %v216, -inf
        %v458 = vsel %vm429, %v217, -inf
        %v459 = vsel %vm430, %v218, -inf
        %v460 = vsel %vm430, %v219, -inf
        %v461 = vsel %vm431, %v220, -inf
        %v462 = vsel %vm431, %v221, -inf
        %v463 = vsel %vm432, %v222, -inf
        %v464 = vsel %vm432, %v223, -inf
        %vm465 = vcmask 31744
        %v466 = vsel %vm465, %v433, -inf
        %v467 = vsel %vm465, %v435, -inf
        %v468 = vsel %vm465, %v437, -inf
        %v469 = vmax.f32 %v466, %v468
        %v470 = vsel %vm465, %v439, -inf
        %v471 = vmax.f32 %v467, %v470
        %v472 = vsel %vm465, %v441, -inf
        %v473 = vmax.f32 %v469, %v472
        %v474 = vsel %vm465, %v443, -inf
        %v475 = vmax.f32 %v471, %v474
        %v476 = vsel %vm465, %v445, -inf
        %v477 = vmax.f32 %v473, %v476
        %v478 = vsel %vm465, %v447, -inf
        %v479 = vmax.f32 %v475, %v478
        %v480 = vsel %vm465, %v449, -inf
        %v481 = vmax.f32 %v477, %v480
        %v482 = vsel %vm465, %v451, -inf
        %v483 = vmax.f32 %v479, %v482
        %v484 = vsel %vm465, %v453, -inf
        %v485 = vmax.f32 %v481, %v484
        %v486 = vsel %vm465, %v455, -inf
        %v487 = vmax.f32 %v483, %v486
        %v488 = vsel %vm465, %v457, -inf
        %v489 = vmax.f32 %v485, %v488
        %v490 = vsel %vm465, %v459, -inf
        %v491 = vmax.f32 %v487, %v490
        %v492 = vsel %vm465, %v461, -inf
        %v493 = vmax.f32 %v489, %v492
        %v494 = vsel %vm465, %v463, -inf
        %v495 = vmax.f32 %v491, %v494
        %v496 = vmax.f32 %v493, %v495
        %v497 = vsel %vm465, %v434, -inf
        %v498 = vsel %vm465, %v436, -inf
        %v499 = vsel %vm465, %v438, -inf
        %v500 = vmax.f32 %v497, %v499
        %v501 = vsel %vm465, %v440, -inf
        %v502 = vmax.f32 %v498, %v501
        %v503 = vsel %vm465, %v442, -inf
        %v504 = vmax.f32 %v500, %v503
        %v505 = vsel %vm465, %v444, -inf
        %v506 = vmax.f32 %v502, %v505
        %v507 = vsel %vm465, %v446, -inf
        %v508 = vmax.f32 %v504, %v507
        %v509 = vsel %vm465, %v448, -inf
        %v510 = vmax.f32 %v506, %v509
        %v511 = vsel %vm465, %v450, -inf
        %v512 = vmax.f32 %v508, %v511
        %v513 = vsel %vm465, %v452, -inf
        %v514 = vmax.f32 %v510, %v513
        %v515 = vsel %vm465, %v454, -inf
        %v516 = vmax.f32 %v512, %v515
        %v517 = vsel %vm465, %v456, -inf
        %v518 = vmax.f32 %v514, %v517
        %v519 = vsel %vm465, %v458, -inf
        %v520 = vmax.f32 %v516, %v519
        %v521 = vsel %vm465, %v460, -inf
        %v522 = vmax.f32 %v518, %v521
        %v523 = vsel %vm465, %v462, -inf
        %v524 = vmax.f32 %v520, %v523
        %v525 = vsel %vm465, %v464, -inf
        %v526 = vmax.f32 %v522, %v525
        %v527 = vmax.f32 %v524, %v526
        %v528 = vsel %vm271, 1, 0
        %v529 = vsel %vm272, 1, 0
        %v530 = vlaneseq
        %v531 = vshrl.u32 %v530, 7
        %v532 = vsub.s32 0, %v531
        %v533 = vrot.slane %v528, %v532
        %v534 = vlaneseq
        %v535 = vshrl.u32 %v534, 7
        %v536 = vsub.s32 1, %v535
        %v537 = vrot.slane %v528, %v536
        %v538 = vlaneseq
        %v539 = vshrl.u32 %v538, 7
        %v540 = vsub.s32 2, %v539
        %v541 = vrot.slane %v528, %v540
        %v542 = vlaneseq
        %v543 = vshrl.u32 %v542, 7
        %v544 = vsub.s32 3, %v543
        %v545 = vrot.slane %v528, %v544
        %v546 = vlaneseq
        %v547 = vshrl.u32 %v546, 7
        %v548 = vsub.s32 4, %v547
        %v549 = vrot.slane %v528, %v548
        %v550 = vlaneseq
        %v551 = vshrl.u32 %v550, 7
        %v552 = vsub.s32 5, %v551
        %v553 = vrot.slane %v528, %v552
        %v554 = vlaneseq
        %v555 = vshrl.u32 %v554, 7
        %v556 = vsub.s32 6, %v555
        %v557 = vrot.slane %v528, %v556
        %v558 = vlaneseq
        %v559 = vshrl.u32 %v558, 7
        %v560 = vsub.s32 7, %v559
        %v561 = vrot.slane %v528, %v560
        %v562 = vlaneseq
        %v563 = vshrl.u32 %v562, 7
        %v564 = vsub.s32 0, %v563
        %v565 = vrot.slane %v529, %v564
        %v566 = vlaneseq
        %v567 = vshrl.u32 %v566, 7
        %v568 = vsub.s32 1, %v567
        %v569 = vrot.slane %v529, %v568
        %v570 = vlaneseq
        %v571 = vshrl.u32 %v570, 7
        %v572 = vsub.s32 2, %v571
        %v573 = vrot.slane %v529, %v572
        %v574 = vlaneseq
        %v575 = vshrl.u32 %v574, 7
        %v576 = vsub.s32 3, %v575
        %v577 = vrot.slane %v529, %v576
        %v578 = vlaneseq
        %v579 = vshrl.u32 %v578, 7
        %v580 = vsub.s32 4, %v579
        %v581 = vrot.slane %v529, %v580
        %v582 = vlaneseq
        %v583 = vshrl.u32 %v582, 7
        %v584 = vsub.s32 5, %v583
        %v585 = vrot.slane %v529, %v584
        %v586 = vlaneseq
        %v587 = vshrl.u32 %v586, 7
        %v588 = vsub.s32 6, %v587
        %v589 = vrot.slane %v529, %v588
        %v590 = vlaneseq
        %v591 = vshrl.u32 %v590, 7
        %v592 = vsub.s32 7, %v591
        %v593 = vrot.slane %v529, %v592
        %vm594 = vcmp.ne.s32.totalorder %v533, 0
        %vm595 = vcmp.ne.s32.totalorder %v537, 0
        %vm596 = vcmp.ne.s32.totalorder %v541, 0
        %vm597 = vcmp.ne.s32.totalorder %v545, 0
        %vm598 = vcmp.ne.s32.totalorder %v549, 0
        %vm599 = vcmp.ne.s32.totalorder %v553, 0
        %vm600 = vcmp.ne.s32.totalorder %v557, 0
        %vm601 = vcmp.ne.s32.totalorder %v561, 0
        %vm602 = vcmp.ne.s32.totalorder %v565, 0
        %vm603 = vcmp.ne.s32.totalorder %v569, 0
        %vm604 = vcmp.ne.s32.totalorder %v573, 0
        %vm605 = vcmp.ne.s32.totalorder %v577, 0
        %vm606 = vcmp.ne.s32.totalorder %v581, 0
        %vm607 = vcmp.ne.s32.totalorder %v585, 0
        %vm608 = vcmp.ne.s32.totalorder %v589, 0
        %vm609 = vcmp.ne.s32.totalorder %v593, 0
        %v610 = vsel %vm594, 1, 0
        %v611 = vsel %vm595, 1, 0
        %v612 = vsel %vm596, 1, 0
        %v613 = vsel %vm597, 1, 0
        %v614 = vsel %vm598, 1, 0
        %v615 = vsel %vm599, 1, 0
        %v616 = vsel %vm600, 1, 0
        %v617 = vsel %vm601, 1, 0
        %v618 = vsel %vm602, 1, 0
        %v619 = vsel %vm603, 1, 0
        %v620 = vsel %vm604, 1, 0
        %v621 = vsel %vm605, 1, 0
        %v622 = vsel %vm606, 1, 0
        %v623 = vsel %vm607, 1, 0
        %v624 = vsel %vm608, 1, 0
        %v625 = vsel %vm609, 1, 0
        %vm626 = vcmp.eq.s32.totalorder %v610, 1
        %vm627 = vcmp.eq.s32.totalorder %v611, 1
        %vm628 = vcmp.eq.s32.totalorder %v612, 1
        %vm629 = vcmp.eq.s32.totalorder %v613, 1
        %vm630 = vcmp.eq.s32.totalorder %v614, 1
        %vm631 = vcmp.eq.s32.totalorder %v615, 1
        %vm632 = vcmp.eq.s32.totalorder %v616, 1
        %vm633 = vcmp.eq.s32.totalorder %v617, 1
        %vm634 = vcmp.eq.s32.totalorder %v618, 1
        %vm635 = vcmp.eq.s32.totalorder %v619, 1
        %vm636 = vcmp.eq.s32.totalorder %v620, 1
        %vm637 = vcmp.eq.s32.totalorder %v621, 1
        %vm638 = vcmp.eq.s32.totalorder %v622, 1
        %vm639 = vcmp.eq.s32.totalorder %v623, 1
        %vm640 = vcmp.eq.s32.totalorder %v624, 1
        %vm641 = vcmp.eq.s32.totalorder %v625, 1
        %v642 = vsel %vm626, %v192, -inf
        %v643 = vsel %vm626, %v193, -inf
        %v644 = vsel %vm627, %v194, -inf
        %v645 = vsel %vm627, %v195, -inf
        %v646 = vsel %vm628, %v196, -inf
        %v647 = vsel %vm628, %v197, -inf
        %v648 = vsel %vm629, %v198, -inf
        %v649 = vsel %vm629, %v199, -inf
        %v650 = vsel %vm630, %v200, -inf
        %v651 = vsel %vm630, %v201, -inf
        %v652 = vsel %vm631, %v202, -inf
        %v653 = vsel %vm631, %v203, -inf
        %v654 = vsel %vm632, %v204, -inf
        %v655 = vsel %vm632, %v205, -inf
        %v656 = vsel %vm633, %v206, -inf
        %v657 = vsel %vm633, %v207, -inf
        %v658 = vsel %vm634, %v208, -inf
        %v659 = vsel %vm634, %v209, -inf
        %v660 = vsel %vm635, %v210, -inf
        %v661 = vsel %vm635, %v211, -inf
        %v662 = vsel %vm636, %v212, -inf
        %v663 = vsel %vm636, %v213, -inf
        %v664 = vsel %vm637, %v214, -inf
        %v665 = vsel %vm637, %v215, -inf
        %v666 = vsel %vm638, %v216, -inf
        %v667 = vsel %vm638, %v217, -inf
        %v668 = vsel %vm639, %v218, -inf
        %v669 = vsel %vm639, %v219, -inf
        %v670 = vsel %vm640, %v220, -inf
        %v671 = vsel %vm640, %v221, -inf
        %v672 = vsel %vm641, %v222, -inf
        %v673 = vsel %vm641, %v223, -inf
        %v674 = vsel %vm465, %v642, -inf
        %v675 = vsel %vm465, %v644, -inf
        %v676 = vsel %vm465, %v646, -inf
        %v677 = vmax.f32 %v674, %v676
        %v678 = vsel %vm465, %v648, -inf
        %v679 = vmax.f32 %v675, %v678
        %v680 = vsel %vm465, %v650, -inf
        %v681 = vmax.f32 %v677, %v680
        %v682 = vsel %vm465, %v652, -inf
        %v683 = vmax.f32 %v679, %v682
        %v684 = vsel %vm465, %v654, -inf
        %v685 = vmax.f32 %v681, %v684
        %v686 = vsel %vm465, %v656, -inf
        %v687 = vmax.f32 %v683, %v686
        %v688 = vsel %vm465, %v658, -inf
        %v689 = vmax.f32 %v685, %v688
        %v690 = vsel %vm465, %v660, -inf
        %v691 = vmax.f32 %v687, %v690
        %v692 = vsel %vm465, %v662, -inf
        %v693 = vmax.f32 %v689, %v692
        %v694 = vsel %vm465, %v664, -inf
        %v695 = vmax.f32 %v691, %v694
        %v696 = vsel %vm465, %v666, -inf
        %v697 = vmax.f32 %v693, %v696
        %v698 = vsel %vm465, %v668, -inf
        %v699 = vmax.f32 %v695, %v698
        %v700 = vsel %vm465, %v670, -inf
        %v701 = vmax.f32 %v697, %v700
        %v702 = vsel %vm465, %v672, -inf
        %v703 = vmax.f32 %v699, %v702
        %v704 = vmax.f32 %v701, %v703
        %v705 = vsel %vm465, %v643, -inf
        %v706 = vsel %vm465, %v645, -inf
        %v707 = vsel %vm465, %v647, -inf
        %v708 = vmax.f32 %v705, %v707
        %v709 = vsel %vm465, %v649, -inf
        %v710 = vmax.f32 %v706, %v709
        %v711 = vsel %vm465, %v651, -inf
        %v712 = vmax.f32 %v708, %v711
        %v713 = vsel %vm465, %v653, -inf
        %v714 = vmax.f32 %v710, %v713
        %v715 = vsel %vm465, %v655, -inf
        %v716 = vmax.f32 %v712, %v715
        %v717 = vsel %vm465, %v657, -inf
        %v718 = vmax.f32 %v714, %v717
        %v719 = vsel %vm465, %v659, -inf
        %v720 = vmax.f32 %v716, %v719
        %v721 = vsel %vm465, %v661, -inf
        %v722 = vmax.f32 %v718, %v721
        %v723 = vsel %vm465, %v663, -inf
        %v724 = vmax.f32 %v720, %v723
        %v725 = vsel %vm465, %v665, -inf
        %v726 = vmax.f32 %v722, %v725
        %v727 = vsel %vm465, %v667, -inf
        %v728 = vmax.f32 %v724, %v727
        %v729 = vsel %vm465, %v669, -inf
        %v730 = vmax.f32 %v726, %v729
        %v731 = vsel %vm465, %v671, -inf
        %v732 = vmax.f32 %v728, %v731
        %v733 = vsel %vm465, %v673, -inf
        %v734 = vmax.f32 %v730, %v733
        %v735 = vmax.f32 %v732, %v734
        %v736 = vsel %vm294, 1, 0
        %v737 = vsel %vm295, 1, 0
        %vm738 = vcmp.eq.s32.totalorder %v736, 1
        %vm739 = vcmp.eq.s32.totalorder %v737, 1
        %v740 = vsel %vm738, %v496, -inf
        %v741 = vsel %vm739, %v527, -inf
        %v742 = vsel %vm465, %v740, -inf
        %v743 = vsel %vm465, %v741, -inf
        %v744 = vmax.f32 %v742, %v743
        %v745 = vrot.slane %v744, 4
        %v746 = vmax.f32 %v744, %v745
        %v747 = vrot.slane %v746, 2
        %v748 = vmax.f32 %v746, %v747
        %v749 = vrot.slane %v748, 1
        %v750 = vmax.f32 %v748, %v749
        %p751 = scmp.le.s32.totalorder %s241, %s234
        %p752 = scmp.le.s32.totalorder %s287, %s280
        %p753 = por %p751, %p752
        %s754 = scalar_select %p753, 1, 0
        %v755 = vstv %s754
        %vm756 = vcmp.eq.s32.totalorder %v755, 1
        %v757 = vsel %vm756, 0.0, %v750
        %v758 = vsel %vm317, 1, 0
        %v759 = vsel %vm318, 1, 0
        %vm760 = vcmp.eq.s32.totalorder %v758, 1
        %vm761 = vcmp.eq.s32.totalorder %v759, 1
        %v762 = vsel %vm760, %v496, -inf
        %v763 = vsel %vm761, %v527, -inf
        %v764 = vsel %vm465, %v762, -inf
        %v765 = vsel %vm465, %v763, -inf
        %v766 = vmax.f32 %v764, %v765
        %v767 = vrot.slane %v766, 4
        %v768 = vmax.f32 %v766, %v767
        %v769 = vrot.slane %v768, 2
        %v770 = vmax.f32 %v768, %v769
        %v771 = vrot.slane %v770, 1
        %v772 = vmax.f32 %v770, %v771
        %p773 = scmp.le.s32.totalorder %s310, %s302
        %p774 = por %p751, %p773
        %s775 = scalar_select %p774, 1, 0
        %v776 = vstv %s775
        %vm777 = vcmp.eq.s32.totalorder %v776, 1
        %v778 = vsel %vm777, 0.0, %v772
        %vm779 = vcmask 1040384
        %v780 = vsel %vm779, %v757, %v778
        %v781 = vsel %vm738, %v704, -inf
        %v782 = vsel %vm739, %v735, -inf
        %v783 = vsel %vm465, %v781, -inf
        %v784 = vsel %vm465, %v782, -inf
        %v785 = vmax.f32 %v783, %v784
        %v786 = vrot.slane %v785, 4
        %v787 = vmax.f32 %v785, %v786
        %v788 = vrot.slane %v787, 2
        %v789 = vmax.f32 %v787, %v788
        %v790 = vrot.slane %v789, 1
        %v791 = vmax.f32 %v789, %v790
        %p792 = scmp.le.s32.totalorder %s264, %s256
        %p793 = por %p792, %p752
        %s794 = scalar_select %p793, 1, 0
        %v795 = vstv %s794
        %vm796 = vcmp.eq.s32.totalorder %v795, 1
        %v797 = vsel %vm796, 0.0, %v791
        %v798 = vsel %vm760, %v704, -inf
        %v799 = vsel %vm761, %v735, -inf
        %v800 = vsel %vm465, %v798, -inf
        %v801 = vsel %vm465, %v799, -inf
        %v802 = vmax.f32 %v800, %v801
        %v803 = vrot.slane %v802, 4
        %v804 = vmax.f32 %v802, %v803
        %v805 = vrot.slane %v804, 2
        %v806 = vmax.f32 %v804, %v805
        %v807 = vrot.slane %v806, 1
        %v808 = vmax.f32 %v806, %v807
        %p809 = por %p792, %p773
        %s810 = scalar_select %p809, 1, 0
        %v811 = vstv %s810
        %vm812 = vcmp.eq.s32.totalorder %v811, 1
        %v813 = vsel %vm812, 0.0, %v808
        %v814 = vsel %vm779, %v797, %v813
        %vm815 = vcmask 25600
        %816 = vst.msk [vmem:[%s148] sm:$0x3] %vm815, %v780
        %817 = vst.msk [vmem:[%s148 + $0x2] sm:$0x3] %vm815, %v814
        %s818 = sand.u32 %s79, 1
        %s819 = scalar_lea.sflag [#allocation6], %s818
        %s820 = sand.u32 %s79, 1
        %s821 = smul.addr %s820, 4
        %s822 = scalar_lea.vmem [#allocation5], %s821
        // Predicated region
        $region25: #{tpu_custom_call.1} parent=23 // pred_check
          %p823 = pneg %p89
        $region26: #{tpu_custom_call.1} parent=23 // pred_check_branch
          %825 = sbr.rel (%p823) target = $region28
        $region27: #{tpu_custom_call.1} parent=23 // pred_region
          %s827 = ssub.s32 64, 64
          %828 = vsyncadd %s819, %s827
          %s829 = smul.addr %s32, 2
          %s830 = sadd.s32 %s31, %s829
          %s831 = smul.addr %s830, 32
          %s832 = scalar_lea.hbm %s3, %s831
          %s833 = sshll.u32 %s822, 4
          %s834 = int_to_ptr.vmem [resolvable:$true] %s833
          %839 = dma.vmem_to_hbm [thread:$0]  %s834, 64, %s832, %s819, 32, 32, 2
        $region28: #{tpu_custom_call.1} parent=23 // pred_fallthru
          _
      $region24: #{tpu_custom_call.1} parent=5 // pred_fallthru
        _
      %p840 = scmp.le.s32.totalorder 2, %s22
      // Predicated region
      $region29: #{tpu_custom_call.1} parent=5 // pred_check
        %p841 = pneg %p840
      $region30: #{tpu_custom_call.1} parent=5 // pred_check_branch
        %843 = sbr.rel (%p841) target = $region32
      $region31: #{tpu_custom_call.1} parent=5 // pred_region
        %s844 = ssub.s32 %s22, 2
        // Predicated region
        $region33: #{tpu_custom_call.1} parent=31 // pred_check
          %p845 = pneg %p95
        $region34: #{tpu_custom_call.1} parent=31 // pred_check_branch
          %847 = sbr.rel (%p845) target = $region36
        $region35: #{tpu_custom_call.1} parent=31 // pred_region
          %s848 = sand.u32 %s80, 1
          %s849 = scalar_lea.sflag [#allocation6], %s848
          %s850 = sand.u32 %s80, 1
          %s851 = smul.addr %s850, 4
          %s852 = scalar_lea.vmem [#allocation5], %s851
          %853 = dma.done %s849, 64
        $region36: #{tpu_custom_call.1} parent=31 // pred_fallthru
          _
      $region32: #{tpu_custom_call.1} parent=5 // pred_fallthru
        _
    $region6: #{tpu_custom_call.1} parent=1 // loop_footer
      %s26 = sadd.s32 1, %s22
    $region7: #{tpu_custom_call.1} parent=1 // loop_footer_branch
      %21 = sbr.rel target = $region3
    $region8: #{tpu_custom_call.1} parent=1 // loop_exit
      _
    %854 = vsyncpa [#allocation6], 1
    %s855 = scalar_lea.sflag [#allocation6], 1
    %856 = vsyncpa %s855, 1

</llo_original>
